<compile_context>
chip_gen: v7x
topology: tpu7x:2x2x1
jax: 0.10.0
libtpu: 0.0.40
codegen_flags: <defaults>
</compile_context>

<pallas_src>
import functools

import jax
import jax.numpy as jnp
from jax.experimental import pallas as pl
from jax.experimental.pallas import tpu as pltpu

_LANE = 128


def _li_scaled_kernel(x_ref, mem_ref, out_ref, *, coeff):
    """new_mem = mem - coeff * (max_c(x) - x); coeff = inh (constant) or inh*threshold."""
    x = x_ref[...].astype(jnp.float32)          # (1, C, T)
    mem = mem_ref[...].astype(jnp.float32)      # (1, C, T)
    xmax = jnp.max(x, axis=1, keepdims=True)    # channel max: cross-sublane reduce (XLU)
    out_ref[...] = (mem - coeff * (xmax - x)).astype(out_ref.dtype)


def _li_max_kernel(x_ref, xori_ref, mem_ref, out_ref, *, inh):
    """new_mem = mem - inh * max_c(xori) * (max_c(x) - x)."""
    x = x_ref[...].astype(jnp.float32)
    xori = xori_ref[...].astype(jnp.float32)
    mem = mem_ref[...].astype(jnp.float32)
    xmax = jnp.max(x, axis=1, keepdims=True)
    orimax = jnp.max(xori, axis=1, keepdims=True)   # .detach() irrelevant (forward only)
    out_ref[...] = (mem - inh * orimax * (xmax - x)).astype(out_ref.dtype)


def _choose_hw_tile(C, HW, itemsize, target_block_bytes):
    """Pick T (lane dim of a (1, C, T) block). Full HW if small / fits budget, else a
    multiple of 128 sized to ~target_block_bytes; the ragged last tile is masked by
    Pallas automatically."""
    if HW <= _LANE or C * HW * itemsize <= target_block_bytes:
        return HW
    t = (target_block_bytes // (C * itemsize)) // _LANE * _LANE
    return max(_LANE, int(t))


def lateral_inhibition(x, mem, *, inh, mode="constant", xori=None, threshold=None,
                       target_block_bytes=1 << 20):
    """Returns (x, new_mem) -- x passes through unchanged, as in the PyTorch module."""
    if mode not in ("constant", "max", "threshold"):
        return x, mem                                   # unknown mode: no-op on mem

    N, C, H, W = x.shape
    HW = H * W
    itemsize = jnp.dtype(x.dtype).itemsize
    T = _choose_hw_tile(C, HW, itemsize, target_block_bytes)
    num_hw_tiles = pl.cdiv(HW, T)

    # Copy-free views: fold spatial dims onto the lane axis.
    xf = x.reshape(N, C, HW)
    memf = mem.reshape(N, C, HW)

    blk = pl.BlockSpec((1, C, T), lambda b, t: (b, 0, t))
    out_shape = jax.ShapeDtypeStruct((N, C, HW), mem.dtype)
    cparams = pltpu.CompilerParams(dimension_semantics=("parallel", "parallel"))
    grid = (N, num_hw_tiles)

    if mode in ("constant", "threshold"):
        # TODO(synk): braincog's node.threshold may be a tensor; a Python scalar is assumed here.
        coeff = float(inh) if mode == "constant" else float(inh) * float(threshold)
        new_mem = pl.pallas_call(
            functools.partial(_li_scaled_kernel, coeff=coeff),
            grid=grid,
            in_specs=[blk, blk],
            out_specs=blk,
            out_shape=out_shape,
            input_output_aliases={1: 0},        # mem -> output (in-place when donated)
            compiler_params=cparams,
        )(xf, memf)
    else:  # mode == "max"
        assert xori is not None, "mode='max' requires xori"
        xorif = xori.reshape(N, C, HW)
        new_mem = pl.pallas_call(
            functools.partial(_li_max_kernel, inh=float(inh)),
            grid=grid,
            in_specs=[blk, blk, blk],
            out_specs=blk,
            out_shape=out_shape,
            input_output_aliases={2: 0},        # mem -> output
            compiler_params=cparams,
        )(xf, xorif, memf)

    return x, new_mem.reshape(N, C, H, W)


def _reference(x, mem, *, inh, mode="constant", xori=None, threshold=None):
    x32 = x.astype(jnp.float32)
    mem32 = mem.astype(jnp.float32)
    xmax = jnp.max(x32, axis=1, keepdims=True)
    if mode == "constant":
        out = mem32 - inh * (xmax - x32)
    elif mode == "max":
        out = mem32 - inh * jnp.max(xori.astype(jnp.float32), axis=1, keepdims=True) * (xmax - x32)
    elif mode == "threshold":
        out = mem32 - inh * threshold * (xmax - x32)
    else:
        out = mem32
    return out.astype(mem.dtype)


if __name__ == "__main__":
    key = jax.random.PRNGKey(0)
    k1, k2, k3 = jax.random.split(key, 3)

    inh = 0.5
    threshold = 1.0  # deterministic synthetic node.threshold
    ok = True

    def check(got, want, tol=1e-5):
        return bool(jnp.allclose(got.astype(jnp.float32), want.astype(jnp.float32),
                                 atol=tol, rtol=tol))

    # --- base case: N=2, C=4, 16x16, f32, all three modes ---
    N, C, H, W = 2, 4, 16, 16
    x = (jax.random.uniform(k1, (N, C, H, W), jnp.float32) > 0.5).astype(jnp.float32)
    mem = jax.random.normal(k2, (N, C, H, W), jnp.float32)
    xori = jax.random.uniform(k3, (N, C, H, W), jnp.float32)

    x_out, mem_c = lateral_inhibition(x, mem, inh=inh, mode="constant")
    jax.block_until_ready(mem_c)
    ok &= check(x_out, x)
    ok &= check(mem_c, _reference(x, mem, inh=inh, mode="constant"))

    _, mem_m = lateral_inhibition(x, mem, inh=inh, mode="max", xori=xori)
    jax.block_until_ready(mem_m)
    ok &= check(mem_m, _reference(x, mem, inh=inh, mode="max", xori=xori))

    _, mem_t = lateral_inhibition(x, mem, inh=inh, mode="threshold", threshold=threshold)
    jax.block_until_ready(mem_t)
    ok &= check(mem_t, _reference(x, mem, inh=inh, mode="threshold", threshold=threshold))

    # --- non-128-multiple spatial dim (7x7): full-HW (49-lane) single tile, no padding copies ---
    xs = jax.random.normal(jax.random.PRNGKey(1), (2, 4, 7, 7), jnp.float32)
    ms = jax.random.normal(jax.random.PRNGKey(2), (2, 4, 7, 7), jnp.float32)
    _, mem_s = lateral_inhibition(xs, ms, inh=inh, mode="constant")
    jax.block_until_ready(mem_s)
    ok &= check(mem_s, _reference(xs, ms, inh=inh, mode="constant"))

    # --- force multi-tile HW grid with a ragged last tile (Pallas boundary masking) ---
    xl = jax.random.normal(jax.random.PRNGKey(3), (2, 4, 40, 40), jnp.float32)
    ml = jax.random.normal(jax.random.PRNGKey(4), (2, 4, 40, 40), jnp.float32)
    _, mem_l = lateral_inhibition(xl, ml, inh=inh, mode="constant", target_block_bytes=8192)
    jax.block_until_ready(mem_l)
    ok &= check(mem_l, _reference(xl, ml, inh=inh, mode="constant"))

    xo = jax.random.normal(jax.random.PRNGKey(5), (2, 4, 40, 40), jnp.float32)
    _, mem_lm = lateral_inhibition(xl, ml, inh=inh, mode="max", xori=xo, target_block_bytes=8192)
    jax.block_until_ready(mem_lm)
    ok &= check(mem_lm, _reference(xl, ml, inh=inh, mode="max", xori=xo))

    # --- bf16 I/O (compute in f32 inside kernel) ---
    xb = x.astype(jnp.bfloat16)
    mb = mem.astype(jnp.bfloat16)
    _, mem_b = lateral_inhibition(xb, mb, inh=inh, mode="constant")
    jax.block_until_ready(mem_b)
    ok &= check(mem_b, _reference(xb, mb, inh=inh, mode="constant"), tol=5e-2)

    if ok:
        print("KERNEL_OK")
    else:
        raise SystemExit("mismatch vs reference")
</pallas_src>

<mosaic_0001>
module attributes {stable_mosaic.version = 11 : i64} {
  func.func @_li_scaled_kernel(%arg0: i32, %arg1: i32, %arg2: memref<1x4x256xf32, #tpu.memory_space<vmem>>, %arg3: memref<1x4x256xf32, #tpu.memory_space<vmem>>, %arg4: memref<1x4x256xf32, #tpu.memory_space<vmem>>) attributes {dimension_semantics = [#tpu.dimension_semantics<parallel>, #tpu.dimension_semantics<parallel>], iteration_bounds = array<i64: 2, 1>, scalar_prefetch = 0 : i64, scratch_operands = 0 : i64, tpu.core_type = #tpu.core_type<tc>, window_params = [{transform_indices = @transform_0, window_bounds = array<i64: 1, 4, 256>}, {transform_indices = @transform_1, window_bounds = array<i64: 1, 4, 256>}, {transform_indices = @transform_2, window_bounds = array<i64: 1, 4, 256>}]} {
    %c0 = arith.constant 0 : index
    %c0_0 = arith.constant 0 : index
    %c0_1 = arith.constant 0 : index
    %0 = vector.load %arg2[%c0, %c0_0, %c0_1] : memref<1x4x256xf32, #tpu.memory_space<vmem>>, vector<1x4x256xf32>
    %c0_2 = arith.constant 0 : index
    %c0_3 = arith.constant 0 : index
    %c0_4 = arith.constant 0 : index
    %1 = vector.load %arg3[%c0_2, %c0_3, %c0_4] : memref<1x4x256xf32, #tpu.memory_space<vmem>>, vector<1x4x256xf32>
    %cst = arith.constant dense<0xFF800000> : vector<1x256xf32>
    %2 = vector.multi_reduction <maximumf>, %0, %cst [1] : vector<1x4x256xf32> to vector<1x256xf32>
    %3 = vector.shape_cast %2 : vector<1x256xf32> to vector<1x1x256xf32>
    %4 = vector.broadcast %3 : vector<1x1x256xf32> to vector<1x4x256xf32>
    %5 = arith.subf %4, %0 : vector<1x4x256xf32>
    %cst_5 = arith.constant 5.000000e-01 : f32
    %6 = vector.broadcast %cst_5 : f32 to vector<1x4x256xf32>
    %7 = arith.mulf %6, %5 : vector<1x4x256xf32>
    %8 = arith.subf %1, %7 : vector<1x4x256xf32>
    %c0_6 = arith.constant 0 : index
    %c0_7 = arith.constant 0 : index
    %c0_8 = arith.constant 0 : index
    %9 = vector.load %arg4[%c0_6, %c0_7, %c0_8] : memref<1x4x256xf32, #tpu.memory_space<vmem>>, vector<1x4x256xf32>
    tpu.vector_store %arg4[%c0_6, %c0_7, %c0_8], %8 {strides = array<i32>} : memref<1x4x256xf32, #tpu.memory_space<vmem>>, vector<1x4x256xf32>,
    return
  }
  func.func @transform_0(%arg0: i32, %arg1: i32) -> (i32, i32, i32) {
    %c0_i32 = arith.constant 0 : i32
    %c0_i32_0 = arith.constant 0 : i32
    return %arg0, %c0_i32, %arg1 : i32, i32, i32
  }
  func.func @transform_1(%arg0: i32, %arg1: i32) -> (i32, i32, i32) {
    %c0_i32 = arith.constant 0 : i32
    %c0_i32_0 = arith.constant 0 : i32
    return %arg0, %c0_i32, %arg1 : i32, i32, i32
  }
  func.func @transform_2(%arg0: i32, %arg1: i32) -> (i32, i32, i32) {
    %c0_i32 = arith.constant 0 : i32
    %c0_i32_0 = arith.constant 0 : i32
    return %arg0, %c0_i32, %arg1 : i32, i32, i32
  }
}

</mosaic_0001>

<llo_original>
// kernel: tpu_custom_call.1
$region0: #{tpu_custom_call.1}
  #allocation0 [shape = 'u32[]', space=smem, size = 0x4, offset = 0x4, fixed_abs, tag = 'smem constant byte address 0x4 - core index']
  #allocation1 [shape = 'u32[144,128]{1,0:T(1,128)}', space=vmem, size = 0x12000, scoped, tag = 'internal scratch']
  %s0 = inlined_call_operand.vmem [shape: f32[2,4,256], index: 0, kind: input, shape index: {}]
  %s1 = inlined_call_operand.hbm [shape: f32[2,4,256], index: 1, kind: input, shape index: {}, may-alias: {1,2}]
  %s2 = inlined_call_operand.hbm [shape: f32[2,4,256], index: 2, kind: output, shape index: {}, may-alias: {1,2}]
  %s3 = sld [smem:[#allocation0]]
  $region45: #{tpu_custom_call.1} parent=0
    _
  %s5 = ssub.s32 1, %s3
  %s6 = scalar_select 0, %s5, %s3
  $region1: #{tpu_custom_call.1} parent=0
    #allocation2 [shape = 'u8[8192]{0}', space=vmem, size = 0x2000, scoped, tag = 'input window, operand 1']
    #allocation3 [shape = 's32[2]{0}', space=sflag, size = 0x8, scoped, tag = 'scoped memory for tpu_custom_call.1']
    #allocation4 [shape = 's32[2]{0}', space=sflag, size = 0x8, scoped, tag = 'scoped memory for tpu_custom_call.1']
    #allocation5 [shape = 'u8[8192]{0}', space=vmem, size = 0x2000, scoped, tag = 'output window, operand 0']
    %7 = vsyncpa [#allocation3], 0
    %s8 = scalar_lea.sflag [#allocation3], 1
    %9 = vsyncpa %s8, 0
    %10 = vsyncpa [#allocation4], 0
    %s11 = scalar_lea.sflag [#allocation4], 1
    %12 = vsyncpa %s11, 0
    loop: start=0, step=1, limit=4
    $region2: #{tpu_custom_call.1} parent=1 // loop_pre_header
      _
    $region3: #{tpu_custom_call.1} parent=1 // loop_header
      %s14 = sphi 0, %s18
      %p15 = scmp.ge.s32.totalorder %s14, 4
      %s21 = sphi 0, %s33
      %s22 = sphi 0, %s29
      %s23 = sphi 0, %s21
      %s24 = sphi 0, %s22
      %s25 = sphi 0, %s23
      %s26 = sphi 0, %s24
      %s38 = sphi 0, %s40
      %s41 = sphi 0, %s38
      %s42 = sphi 0, %s41
      %s58 = sphi 0, %s42
      %s66 = sphi 0, %s68
      %s69 = sphi 0, %s66
      %s70 = sphi 0, %s69
      %s86 = sphi 0, %s70
      %s94 = sphi 0, %s96
      %s97 = sphi 0, %s94
      %s98 = sphi 0, %s97
      %s114 = sphi 0, %s98
    $region4: #{tpu_custom_call.1} parent=1 // loop_header_branch
      %17 = sbr.rel (%p15) target = $region8
    $region5: #{tpu_custom_call.1} parent=1 // loop_body
      %s19 = ssub.s32 %s14, 1
      %s20 = ssub.s32 %s14, 2
      %s27 = sadd.s32 1, %s22
      %p28 = scmp.ge.s32.totalorder %s27, 1
      %s29 = scalar_select %p28, 0, %s27
      %s30 = sadd.s32 1, %s21
      %s31 = scalar_select %p28, %s30, %s21
      %p32 = scmp.ge.s32.totalorder %s31, 2
      %s33 = scalar_select %p32, 0, %s31
      %s34 = ssub.s32 %s21, %s33
      %s35 = ssub.s32 %s22, %s29
      %s36 = sor.u32 %s34, %s35
      %p37 = scmp.eq.s32.totalorder %s36, 0
      %s39 = sadd.s32 %s38, 1
      %s40 = scalar_select %p37, %s38, %s39
      %p43 = pneg %p37
      %p44 = scmp.eq.s32.totalorder %s14, 1
      %p45 = por %p43, %p44
      %p46 = scmp.ne.s32.totalorder %s38, %s41
      %p47 = scmp.eq.s32.totalorder %s14, 0
      %p48 = por %p46, %p47
      %p49 = scmp.ne.s32.totalorder %s38, %s41
      %p50 = scmp.eq.s32.totalorder %s19, 1
      %p51 = por %p49, %p50
      %p52 = scmp.ne.s32.totalorder %s41, %s42
      %p53 = scmp.eq.s32.totalorder %s19, 0
      %p54 = por %p52, %p53
      %p55 = scmp.ne.s32.totalorder %s41, %s42
      %p56 = scmp.eq.s32.totalorder %s20, 1
      %p57 = por %p55, %p56
      %p59 = scmp.ne.s32.totalorder %s42, %s58
      %p60 = scmp.eq.s32.totalorder %s20, 0
      %p61 = por %p59, %p60
      %s62 = ssub.s32 %s21, %s33
      %s63 = ssub.s32 %s22, %s29
      %s64 = sor.u32 %s62, %s63
      %p65 = scmp.eq.s32.totalorder %s64, 0
      %s67 = sadd.s32 %s66, 1
      %s68 = scalar_select %p65, %s66, %s67
      %p71 = pneg %p65
      %p72 = scmp.eq.s32.totalorder %s14, 1
      %p73 = por %p71, %p72
      %p74 = scmp.ne.s32.totalorder %s66, %s69
      %p75 = scmp.eq.s32.totalorder %s14, 0
      %p76 = por %p74, %p75
      %p77 = scmp.ne.s32.totalorder %s66, %s69
      %p78 = scmp.eq.s32.totalorder %s19, 1
      %p79 = por %p77, %p78
      %p80 = scmp.ne.s32.totalorder %s69, %s70
      %p81 = scmp.eq.s32.totalorder %s19, 0
      %p82 = por %p80, %p81
      %p83 = scmp.ne.s32.totalorder %s69, %s70
      %p84 = scmp.eq.s32.totalorder %s20, 1
      %p85 = por %p83, %p84
      %p87 = scmp.ne.s32.totalorder %s70, %s86
      %p88 = scmp.eq.s32.totalorder %s20, 0
      %p89 = por %p87, %p88
      %s90 = ssub.s32 %s21, %s33
      %s91 = ssub.s32 %s22, %s29
      %s92 = sor.u32 %s90, %s91
      %p93 = scmp.eq.s32.totalorder %s92, 0
      %s95 = sadd.s32 %s94, 1
      %s96 = scalar_select %p93, %s94, %s95
      %p99 = pneg %p93
      %p100 = scmp.eq.s32.totalorder %s14, 1
      %p101 = por %p99, %p100
      %p102 = scmp.ne.s32.totalorder %s94, %s97
      %p103 = scmp.eq.s32.totalorder %s14, 0
      %p104 = por %p102, %p103
      %p105 = scmp.ne.s32.totalorder %s94, %s97
      %p106 = scmp.eq.s32.totalorder %s19, 1
      %p107 = por %p105, %p106
      %p108 = scmp.ne.s32.totalorder %s97, %s98
      %p109 = scmp.eq.s32.totalorder %s19, 0
      %p110 = por %p108, %p109
      %p111 = scmp.ne.s32.totalorder %s97, %s98
      %p112 = scmp.eq.s32.totalorder %s20, 1
      %p113 = por %p111, %p112
      %p115 = scmp.ne.s32.totalorder %s98, %s114
      %p116 = scmp.eq.s32.totalorder %s20, 0
      %p117 = por %p115, %p116
      %p118 = scmp.le.s32.totalorder 1, %s14
      %p119 = scmp.lt.s32.totalorder %s14, 3
      %p120 = pnand %p118, %p119
      %p121 = pneg %p120
      // Predicated region
      $region9: #{tpu_custom_call.1} parent=5 // pred_check
        _
      $region10: #{tpu_custom_call.1} parent=5 // pred_check_branch
        %123 = sbr.rel (%p120) target = $region12
      $region11: #{tpu_custom_call.1} parent=5 // pred_region
        %s124 = ssub.s32 %s14, 1
      $region12: #{tpu_custom_call.1} parent=5 // pred_fallthru
        _
      %p125 = scmp.lt.s32.totalorder %s14, 2
      // Predicated region
      $region13: #{tpu_custom_call.1} parent=5 // pred_check
        %p126 = pneg %p125
      $region14: #{tpu_custom_call.1} parent=5 // pred_check_branch
        %128 = sbr.rel (%p126) target = $region16
      $region15: #{tpu_custom_call.1} parent=5 // pred_region
        // Predicated region
        $region17: #{tpu_custom_call.1} parent=15 // pred_check
          %p129 = pneg %p48
        $region18: #{tpu_custom_call.1} parent=15 // pred_check_branch
          %131 = sbr.rel (%p129) target = $region20
        $region19: #{tpu_custom_call.1} parent=15 // pred_region
          %s132 = smul.u32 2, %s22
          %p133 = scmp.lt.s32.totalorder %s21, 1
          %s134 = scalar_select %p133, %s21, 1
          %p135 = scmp.lt.s32.totalorder %s132, 1
          %s136 = scalar_select %p135, %s132, 1
          %s137 = smul.addr %s134, 2
          %s138 = sadd.s32 %s136, %s137
          %s139 = smul.addr %s138, 4
          %s140 = scalar_lea.vmem %s0, %s139
          %s141 = smul.u32 2, %s22
        $region20: #{tpu_custom_call.1} parent=15 // pred_fallthru
          _
        // Predicated region
        $region21: #{tpu_custom_call.1} parent=15 // pred_check
          %p142 = pneg %p76
        $region22: #{tpu_custom_call.1} parent=15 // pred_check_branch
          %144 = sbr.rel (%p142) target = $region24
        $region23: #{tpu_custom_call.1} parent=15 // pred_region
          %s145 = sand.u32 %s66, 1
          %s146 = scalar_lea.sflag [#allocation3], %s145
          %s147 = sand.u32 %s66, 1
          %s148 = smul.addr %s147, 8
          %s149 = scalar_lea.vmem [#allocation2], %s148
          %s150 = smul.u32 2, %s22
          %s152 = ssub.s32 128, 128
          %153 = vsyncadd %s146, %s152
          %s154 = smul.addr %s21, 2
          %s155 = sadd.s32 %s150, %s154
          %s156 = smul.addr %s155, 64
          %s157 = scalar_lea.hbm %s1, %s156
          %s159 = sshll.u32 %s149, 4
          %s160 = int_to_ptr.vmem [resolvable:$true] %s159
          %162 = dma.hbm_to_vmem [thread:$0]  %s157, 128, %s160, %s146
        $region24: #{tpu_custom_call.1} parent=15 // pred_fallthru
          _
      $region16: #{tpu_custom_call.1} parent=5 // pred_fallthru
        _
      %p163 = scmp.le.s32.totalorder 1, %s14
      %p164 = scmp.lt.s32.totalorder %s14, 3
      %p165 = pnand %p163, %p164
      %p166 = pneg %p165
      // Predicated region
      $region25: #{tpu_custom_call.1} parent=5 // pred_check
        _
      $region26: #{tpu_custom_call.1} parent=5 // pred_check_branch
        %168 = sbr.rel (%p165) target = $region28
      $region27: #{tpu_custom_call.1} parent=5 // pred_region
        %s169 = ssub.s32 %s14, 1
        %s170 = sand.u32 %s69, 1
        %s171 = scalar_lea.sflag [#allocation3], %s170
        %s172 = sand.u32 %s69, 1
        %s173 = smul.addr %s172, 8
        %s174 = scalar_lea.vmem [#allocation2], %s173
        // Predicated region
        $region29: #{tpu_custom_call.1} parent=27 // pred_check
          %p175 = pneg %p82
        $region30: #{tpu_custom_call.1} parent=27 // pred_check_branch
          %177 = sbr.rel (%p175) target = $region32
        $region31: #{tpu_custom_call.1} parent=27 // pred_region
          %178 = dma.done %s171, 128
        $region32: #{tpu_custom_call.1} parent=27 // pred_fallthru
          _
        %s179 = smul.u32 2, %s24
        %p180 = scmp.lt.s32.totalorder %s23, 1
        %s181 = scalar_select %p180, %s23, 1
        %p182 = scmp.lt.s32.totalorder %s179, 1
        %s183 = scalar_select %p182, %s179, 1
        %s184 = smul.addr %s181, 2
        %s185 = sadd.s32 %s183, %s184
        %s186 = smul.addr %s185, 4
        %s187 = scalar_lea.vmem %s0, %s186
        %p188 = pneg %p54
        %p189 = pneg %p51
        %s190 = sand.u32 %s69, 1
        %s191 = scalar_lea.sflag [#allocation3], %s190
        %s192 = sand.u32 %s69, 1
        %s193 = smul.addr %s192, 8
        %s194 = scalar_lea.vmem [#allocation2], %s193
        %p195 = pneg %p82
        %p196 = pneg %p79
        %p197 = pneg %p110
        %p198 = pneg %p107
        %s199 = sand.u32 %s97, 1
        %s200 = scalar_lea.sflag [#allocation4], %s199
        %s201 = sand.u32 %s97, 1
        %s202 = smul.addr %s201, 8
        %s203 = scalar_lea.vmem [#allocation5], %s202
        %s204 = smul.u32 2, %s24
        %p205 = scmp.lt.s32.totalorder %s23, 1
        %s206 = scalar_select %p205, %s23, 1
        %p207 = scmp.lt.s32.totalorder %s204, 1
        %s208 = scalar_select %p207, %s204, 1
        %s209 = smul.addr %s206, 2
        %s210 = sadd.s32 %s208, %s209
        %s211 = smul.addr %s210, 4
        %s212 = scalar_lea.vmem %s0, %s211
        %s213 = smul.u32 2, %s24
        %s214 = smul.u32 2, %s24
        %s215 = smul.u32 2, %s24
        %v216 = vld [vmem:[%s212] sm:$0xff]
        %v217 = vld [vmem:[%s174] sm:$0xff]
        %v219 = vcombine.high %v216, %v216
        %vm221 = vcmask 1043456
        %v222 = vsel %vm221, %v216, -inf
        %v223 = vrot.slane %v222, 4
        %v224 = vmax.f32 %v222, %v223
        %v225 = vrot.slane %v224, 2
        %v226 = vmax.f32 %v224, %v225
        %v227 = vrot.slane %v226, 1
        %v228 = vmax.f32 %v226, %v227
        %v229 = vsel %vm221, %v219, -inf
        %v230 = vrot.slane %v229, 4
        %v231 = vmax.f32 %v229, %v230
        %v232 = vrot.slane %v231, 2
        %v233 = vmax.f32 %v231, %v232
        %v234 = vrot.slane %v233, 1
        %v235 = vmax.f32 %v233, %v234
        %v236 = vsub.f32 %v228, %v216
        %v237 = vsub.f32 %v235, %v219
        %v238 = vmul.f32 %v236, 0.5
        %v239 = vmul.f32 %v237, 0.5
        %v242 = vcombine.low %v238, %v239
        %v244 = vsub.f32 %v217, %v242
        %245 = vst [vmem:[%s203] sm:$0xff] %v244
        %s246 = sand.u32 %s97, 1
        %s247 = scalar_lea.sflag [#allocation4], %s246
        %s248 = sand.u32 %s97, 1
        %s249 = smul.addr %s248, 8
        %s250 = scalar_lea.vmem [#allocation5], %s249
        // Predicated region
        $region33: #{tpu_custom_call.1} parent=27 // pred_check
          %p251 = pneg %p107
        $region34: #{tpu_custom_call.1} parent=27 // pred_check_branch
          %253 = sbr.rel (%p251) target = $region36
        $region35: #{tpu_custom_call.1} parent=27 // pred_region
          %s254 = smul.u32 2, %s24
          %s256 = ssub.s32 128, 128
          %257 = vsyncadd %s247, %s256
          %s258 = smul.addr %s23, 2
          %s259 = sadd.s32 %s254, %s258
          %s260 = smul.addr %s259, 64
          %s261 = scalar_lea.hbm %s2, %s260
          %s263 = sshll.u32 %s250, 4
          %s264 = int_to_ptr.vmem [resolvable:$true] %s263
          %266 = dma.vmem_to_hbm [thread:$0]  %s264, 128, %s261, %s247
        $region36: #{tpu_custom_call.1} parent=27 // pred_fallthru
          _
      $region28: #{tpu_custom_call.1} parent=5 // pred_fallthru
        _
      %p267 = scmp.le.s32.totalorder 2, %s14
      // Predicated region
      $region37: #{tpu_custom_call.1} parent=5 // pred_check
        %p268 = pneg %p267
      $region38: #{tpu_custom_call.1} parent=5 // pred_check_branch
        %270 = sbr.rel (%p268) target = $region40
      $region39: #{tpu_custom_call.1} parent=5 // pred_region
        %s271 = ssub.s32 %s14, 2
        // Predicated region
        $region41: #{tpu_custom_call.1} parent=39 // pred_check
          %p272 = pneg %p113
        $region42: #{tpu_custom_call.1} parent=39 // pred_check_branch
          %274 = sbr.rel (%p272) target = $region44
        $region43: #{tpu_custom_call.1} parent=39 // pred_region
          %s275 = sand.u32 %s98, 1
          %s276 = scalar_lea.sflag [#allocation4], %s275
          %s277 = sand.u32 %s98, 1
          %s278 = smul.addr %s277, 8
          %s279 = scalar_lea.vmem [#allocation5], %s278
          %280 = dma.done %s276, 128
        $region44: #{tpu_custom_call.1} parent=39 // pred_fallthru
          _
      $region40: #{tpu_custom_call.1} parent=5 // pred_fallthru
        _
    $region6: #{tpu_custom_call.1} parent=1 // loop_footer
      %s18 = sadd.s32 1, %s14
    $region7: #{tpu_custom_call.1} parent=1 // loop_footer_branch
      %13 = sbr.rel target = $region3
    $region8: #{tpu_custom_call.1} parent=1 // loop_exit
      _
    %281 = vsyncpa [#allocation3], 1
    %s282 = scalar_lea.sflag [#allocation3], 1
    %283 = vsyncpa %s282, 1
    %284 = vsyncpa [#allocation4], 1
    %s285 = scalar_lea.sflag [#allocation4], 1
    %286 = vsyncpa %s285, 1

</llo_original>
